<compile_context>
chip_gen: v6e
topology: v6e:2x2x1
jax: 0.10.0
libtpu: 0.0.40
codegen_flags: <defaults>
</compile_context>

<pallas_src>
import numpy as np
import jax
import jax.numpy as jnp
from jax import lax
from jax.experimental import pallas as pl
from jax.experimental.pallas import tpu as pltpu


# -----------------------------------------------------------------------------
# Host-side (numpy) parameter construction: HiPPO-LegT transition, bilinear
# discretization (scipy.signal.cont2discrete equivalent), Legendre eval matrix
# (scipy.special.eval_legendre equivalent), and the full linear-map fold.
# -----------------------------------------------------------------------------
def transition(N):
    Q = np.arange(N, dtype=np.float64)
    R = (2 * Q + 1)[:, None]
    j, i = np.meshgrid(Q, Q)
    A = np.where(i < j, -1, (-1.0) ** (i - j + 1)) * R
    B = (-1.0) ** Q[:, None] * R
    return A, B


def cont2discrete_bilinear(A, B, dt):
    # scipy.signal.cont2discrete((A, B, C, D), dt, method='bilinear') for the (A, B) pair.
    n = A.shape[0]
    eye = np.eye(n)
    ima = eye - 0.5 * dt * A
    Ad = np.linalg.solve(ima, eye + 0.5 * dt * A)
    Bd = np.linalg.solve(ima, dt * B)
    return Ad, Bd


def eval_legendre_matrix(N, x):
    # == scipy.special.eval_legendre(np.arange(N)[:, None], x).T  -> shape (len(x), N)
    out = np.zeros((N, x.shape[0]), dtype=np.float64)
    out[0] = 1.0
    if N > 1:
        out[1] = x
    for n in range(1, N - 1):
        out[n + 1] = ((2 * n + 1) * x * out[n] - n * out[n - 1]) / (n + 1)
    return out.T


def build_film_params(key, seq_len=32, label_len=8, pred_len=0, enc_in=1):
    pred_len = seq_len if pred_len == 0 else pred_len
    multiscale = [1, 2, 4]
    window_size = [256]
    scales = [(n, i) for n in window_size for i in multiscale]
    S = len(scales)

    seq_len_sc = min(pred_len, seq_len)
    modes = min(32, seq_len_sc // 2)

    # Per-scale input length after PyTorch-style (clipping) negative slice x_enc[:, -x_in_len:].
    Ls = [min(i * pred_len, seq_len) for (_, i) in scales]
    assert len(set(Ls)) == 1, "per-scale input lengths must match (holds for pred_len >= seq_len)"
    # TODO(synk): unequal per-scale input lengths (pred_len < seq_len) would need per-scale folds over different L.
    L = Ls[0]

    A_T, Bv, evT, wr, wi = [], [], [], [], []
    for (n, i) in scales:
        dt = 1.0 / pred_len / i
        A, B = transition(n)
        Ad, Bd = cont2discrete_bilinear(A, B, dt)
        Bd = Bd.squeeze(-1)
        vals = np.arange(0.0, 1.0, dt)
        eval_matrix = eval_legendre_matrix(n, 1 - 2 * vals)          # (len(vals), n)
        A_T.append(Ad.T.astype(np.float32))                          # F.linear(c, A) = c @ A.T
        Bv.append(Bd.astype(np.float32)[None, :])                    # (1, n)
        evT.append(eval_matrix[-pred_len:, :].T.astype(np.float32))  # (n, pred_len)
        key, k1, k2 = jax.random.split(key, 3)
        scale = 1.0 / (n * n)
        w_r = scale * jax.random.uniform(k1, (n, n, modes), dtype=jnp.float32)
        w_i = scale * jax.random.uniform(k2, (n, n, modes), dtype=jnp.float32)
        wr.append(jnp.transpose(w_r, (2, 0, 1)))                     # (modes, n_in, n_out)
        wi.append(jnp.transpose(w_i, (2, 0, 1)))

    key, km, kb = jax.random.split(key, 3)
    mlp_w = jax.random.uniform(km, (S,), dtype=jnp.float32, minval=-0.5, maxval=0.5)
    mlp_b = jax.random.uniform(kb, (), dtype=jnp.float32, minval=-0.5, maxval=0.5)
    mlp_w_np = np.asarray(mlp_w, dtype=np.float64)

    # ---- Stage 1: fold rfft -> spectral mixing -> irfft@t_star -> Legendre recon (f64). ----
    t = np.arange(L)[None, :]
    k = np.arange(modes)[:, None]
    ang = 2.0 * np.pi * k * t / L
    cos_kt = np.cos(ang)                                             # (modes, L)
    sin_kt = np.sin(ang)
    t_star = (pred_len - 1) if seq_len >= pred_len else (L - 1)
    ks = np.arange(modes)
    cr = np.where(ks == 0, 1.0 / L, 2.0 / L * np.cos(2 * np.pi * ks * t_star / L))
    ci = np.where(ks == 0, 0.0, -2.0 / L * np.sin(2 * np.pi * ks * t_star / L))

    # ---- Stage 2+3: fold the HiPPO-LegT recurrence and the 3->1 MLP over scales (f64). ----
    P = pred_len
    Ktot = np.zeros((L, P), dtype=np.float64)
    for s in range(S):
        n = scales[s][0]
        wr_s = np.asarray(wr[s], dtype=np.float64)                   # (modes, N, N) = (k, i, o)
        wi_s = np.asarray(wi[s], dtype=np.float64)
        # irfft coefficients folded into the spectral weights.
        Wr = cr[:, None, None] * wr_s + ci[:, None, None] * wi_s
        Wi = ci[:, None, None] * wr_s - cr[:, None, None] * wi_s
        # Forward DFT (real/imag of rfft, retained modes only) folded in over k.
        G = (np.einsum('kt,kio->tio', cos_kt, Wr)
             - np.einsum('kt,kio->tio', sin_kt, Wi))                 # (L, N, N)
        # Legendre reconstruction folded in over o.
        H_s = np.einsum('tio,op->tip', G, np.asarray(evT[s], dtype=np.float64))   # (L, N, P)

        # Recurrence fold:  c_t = c_{t-1} @ A^T + f_t * B,  c_0 = 0
        #   => sum_t c_t @ H[t] = sum_t f_t * (B @ R[t]),  R[t] = H[t] + A^T @ R[t+1]
        # (backward recursion: no explicit matrix powers, numerically as stable as the
        #  forward recurrence; same f32-rounded A^T / B values the reference path uses).
        AdT = np.asarray(A_T[s], dtype=np.float64)                   # (N, N)
        Bd = np.asarray(Bv[s][0], dtype=np.float64)                  # (N,)
        R = np.zeros((n, P), dtype=np.float64)
        K_s = np.zeros((L, P), dtype=np.float64)
        for tt in range(L - 1, -1, -1):
            R = H_s[tt] + AdT @ R
            K_s[tt] = Bd @ R
        Ktot += mlp_w_np[s] * K_s                                    # MLP-over-scales fold

    params = dict(
        # Device-side parameters (everything the Pallas kernel needs).
        Ktot=jnp.asarray(Ktot.astype(np.float32)),      # (L, P) folded FiLM linear map
        mlp_b=mlp_b,
        affine_weight=jnp.ones((1, 1, enc_in), jnp.float32),
        affine_bias=jnp.zeros((1, 1, enc_in), jnp.float32),
        # Reference-only parameters (used by film_forward_ref to validate the fold).
        A_T=jnp.asarray(np.stack(A_T)),                 # (S, N, N)
        B=jnp.asarray(np.stack(Bv)),                    # (S, 1, N)
        eval_T=jnp.asarray(np.stack(evT)),              # (S, N, P)
        wr=jnp.stack(wr),                               # (S, modes, N, N)
        wi=jnp.stack(wi),                               # (S, modes, N, N)
        mlp_w=mlp_w,
    )
    meta = dict(seq_len=seq_len, pred_len=pred_len, enc_in=enc_in,
                modes=modes, L=L, S=S, t_star=t_star)
    return params, meta


# -----------------------------------------------------------------------------
# Pallas kernel: fused RevIN-normalize -> folded-FiLM GEMM -> RevIN-denormalize.
# -----------------------------------------------------------------------------
def _film_fused_kernel(x_ref, aw_ref, ab_ref, k_ref, bias_ref, out_ref):
    """
    x_ref:    (TM, L)  rows = flattened (batch, channel), time along lanes
    aw_ref:   (TM, 1)  per-row RevIN affine weight
    ab_ref:   (TM, 1)  per-row RevIN affine bias
    k_ref:    (L, P)   folded linear map (HiPPO -> spectral conv -> Legendre -> MLP over scales)
    bias_ref: (1, P)   MLP bias broadcast row
    out_ref:  (TM, P)
    """
    x = x_ref[...]
    # Instance normalization over the time axis (lanes): XLU reductions.
    mean = jnp.mean(x, axis=-1, keepdims=True)
    xc = x - mean
    stdev = jnp.sqrt(jnp.mean(xc * xc, axis=-1, keepdims=True) + 1e-5)
    aw = aw_ref[...]
    ab = ab_ref[...]
    xn = (xc / stdev) * aw + ab

    # The whole FiLM body is one MXU GEMM against the host-folded map.
    dec = jnp.dot(xn, k_ref[...], preferred_element_type=jnp.float32) + bias_ref[...]

    # De-normalization (matches the PyTorch ordering exactly).
    dec = (dec - ab) / (aw + 1e-10)
    out_ref[...] = dec * stdev + mean


def film_fused_pallas(x_ML, aw, ab, Ktot, mlp_b):
    M, L = x_ML.shape
    P = Ktot.shape[-1]

    # Row tile: sublane-aligned. Whole-M block for small M; 256-row tiles over a "parallel"
    # grid when many sequences are batched (that is where MXU occupancy actually comes from).
    if M <= 256:
        TM = max(8, ((M + 7) // 8) * 8)
    else:
        TM = 256
    M_pad = ((M + TM - 1) // TM) * TM
    if M_pad != M:
        x_ML = jnp.pad(x_ML, ((0, M_pad - M), (0, 0)))
        aw = jnp.pad(aw, ((0, M_pad - M), (0, 0)), constant_values=1.0)  # avoid /~0 on pad rows
        ab = jnp.pad(ab, ((0, M_pad - M), (0, 0)))
    bias_row = jnp.full((1, P), mlp_b, dtype=jnp.float32)

    grid_spec = pltpu.PrefetchScalarGridSpec(
        num_scalar_prefetch=0,
        grid=(M_pad // TM,),
        in_specs=[
            pl.BlockSpec((TM, L), lambda i: (i, 0)),      # x rows (tiled over grid)
            pl.BlockSpec((TM, 1), lambda i: (i, 0)),      # per-row affine weight
            pl.BlockSpec((TM, 1), lambda i: (i, 0)),      # per-row affine bias
            pl.BlockSpec((L, P), lambda i: (0, 0)),       # folded FiLM map (resident, ~4 KiB)
            pl.BlockSpec((1, P), lambda i: (0, 0)),       # MLP bias row
        ],
        out_specs=pl.BlockSpec((TM, P), lambda i: (i, 0)),
    )
    out = pl.pallas_call(
        _film_fused_kernel,
        out_shape=jax.ShapeDtypeStruct((M_pad, P), jnp.float32),
        grid_spec=grid_spec,
        compiler_params=pltpu.CompilerParams(
            # Independent row tiles -> shardable across TensorCores when M is large
            # (balanced, unlike the previous 3-step per-scale grid); harmless at 1 step.
            dimension_semantics=("parallel",),
        ),
    )(x_ML, aw, ab, Ktot, bias_row)
    return out[:M]


# -----------------------------------------------------------------------------
# Full FiLM forward: layout plumbing only, all math happens in the fused kernel.
# -----------------------------------------------------------------------------
def film_forward(params, x_enc, x_mark_enc=None, x_dec_in=None, x_mark_dec=None, mask=None):
    Bsz, L, E = x_enc.shape
    M = Bsz * E
    P = params['Ktot'].shape[-1]

    # (B, L, E) -> one row per (batch, channel), time along lanes; m = b*E + e.
    x_ML = jnp.transpose(x_enc, (0, 2, 1)).reshape(M, L).astype(jnp.float32)
    aw = jnp.broadcast_to(params['affine_weight'][0, 0], (Bsz, E)).reshape(M, 1)
    ab = jnp.broadcast_to(params['affine_bias'][0, 0], (Bsz, E)).reshape(M, 1)

    dec_MP = film_fused_pallas(x_ML, aw, ab, params['Ktot'], params['mlp_b'])   # (M, P)
    dec = dec_MP.reshape(Bsz, E, P).transpose(0, 2, 1)                          # (B, P, enc_in)
    return dec[:, -P:, :]


# -----------------------------------------------------------------------------
# Pure-JAX reference (lax.scan recurrence + jnp.fft + raw spectral weights) to
# validate the Pallas kernel and the host-side float64 fold end-to-end.
# -----------------------------------------------------------------------------
def film_forward_ref(params, x_enc, modes, t_star):
    Bsz, seq_len, E = x_enc.shape
    means = jnp.mean(x_enc, axis=1, keepdims=True)
    xc = x_enc - means
    stdev = jnp.sqrt(jnp.var(xc, axis=1, keepdims=True) + 1e-5)
    xn = (xc / stdev) * params['affine_weight'] + params['affine_bias']

    L = xn.shape[1]
    M = Bsz * E
    x_LM = jnp.transpose(xn, (1, 0, 2)).reshape(L, M)
    S = params['A_T'].shape[0]
    decs = []
    for s in range(S):
        A_T = params['A_T'][s]
        Bv = params['B'][s, 0]

        def step(c, f):
            c = c @ A_T + f[:, None] * Bv[None, :]
            return c, c

        c0 = jnp.zeros((M, A_T.shape[0]), jnp.float32)
        _, cs = lax.scan(step, c0, x_LM)                     # (L, M, N)
        x_in_c = jnp.transpose(cs, (1, 2, 0))                # (M, N, L)
        x_ft = jnp.fft.rfft(x_in_c, axis=-1)
        a = x_ft[..., :modes]
        wr = jnp.transpose(params['wr'][s], (1, 2, 0))       # (N, N, modes)
        wi = jnp.transpose(params['wi'][s], (1, 2, 0))
        o_re = jnp.einsum('mix,iox->mox', a.real, wr) - jnp.einsum('mix,iox->mox', a.imag, wi)
        o_im = jnp.einsum('mix,iox->mox', a.real, wi) + jnp.einsum('mix,iox->mox', a.imag, wr)
        out_ft = jnp.zeros((M, wr.shape[1], L // 2 + 1), jnp.complex64)
        out_ft = out_ft.at[..., :modes].set(o_re + 1j * o_im)
        x_out = jnp.fft.irfft(out_ft, n=L, axis=-1)          # (M, N, L)
        x_dec_c = x_out[..., t_star]                         # (M, N)
        decs.append(x_dec_c @ params['eval_T'][s])           # (M, P)
    dec_stack = jnp.stack(decs, axis=0)
    dec = jnp.einsum('smp,s->mp', dec_stack, params['mlp_w']) + params['mlp_b']
    P = dec.shape[-1]
    dec = dec.reshape(Bsz, E, P).transpose(0, 2, 1)
    dec = dec - params['affine_bias']
    dec = dec / (params['affine_weight'] + 1e-10)
    dec = dec * stdev
    dec = dec + means
    return dec[:, -P:, :]


if __name__ == "__main__":
    key = jax.random.PRNGKey(0)
    pkey, xkey = jax.random.split(key)
    batch, seq_len, enc_in = 2, 32, 1

    params, meta = build_film_params(pkey, seq_len=seq_len, label_len=8,
                                     pred_len=0, enc_in=enc_in)

    x_enc = jax.random.normal(xkey, (batch, seq_len, enc_in), dtype=jnp.float32)
    # Unused auxiliary inputs of the original forward signature.
    x_mark_enc = jnp.zeros((batch, seq_len, 1), jnp.float32)
    x_dec_in = jnp.zeros((batch, meta['pred_len'], enc_in), jnp.float32)
    x_mark_dec = jnp.zeros((batch, meta['pred_len'], 1), jnp.float32)

    out = jax.jit(film_forward)(params, x_enc, x_mark_enc, x_dec_in, x_mark_dec)
    out = jax.block_until_ready(out)
    assert out.shape == (batch, meta['pred_len'], enc_in)

    ref = film_forward_ref(params, x_enc, meta['modes'], meta['t_star'])
    np.testing.assert_allclose(np.asarray(out), np.asarray(ref), rtol=1e-2, atol=1e-3)

    print("KERNEL_OK")
</pallas_src>

<mosaic_0001>
module attributes {stable_mosaic.version = 11 : i64} {
  func.func @_film_fused_kernel(%arg0: i32, %arg1: memref<8x32xf32, #tpu.memory_space<vmem>>, %arg2: memref<8x1xf32, #tpu.memory_space<vmem>>, %arg3: memref<8x1xf32, #tpu.memory_space<vmem>>, %arg4: memref<32x32xf32, #tpu.memory_space<vmem>>, %arg5: memref<1x32xf32, #tpu.memory_space<vmem>>, %arg6: memref<8x32xf32, #tpu.memory_space<vmem>>) attributes {dimension_semantics = [#tpu.dimension_semantics<parallel>], iteration_bounds = array<i64: 1>, scalar_prefetch = 0 : i64, scratch_operands = 0 : i64, tpu.core_type = #tpu.core_type<tc>, window_params = [{transform_indices = @transform_0, window_bounds = array<i64: 8, 32>}, {transform_indices = @transform_1, window_bounds = array<i64: 8, 1>}, {transform_indices = @transform_2, window_bounds = array<i64: 8, 1>}, {pipeline_mode = #tpu.pipeline_mode<synchronous>, transform_indices = @transform_3, window_bounds = array<i64: 32, 32>}, {pipeline_mode = #tpu.pipeline_mode<synchronous>, transform_indices = @transform_4, window_bounds = array<i64: 1, 32>}, {transform_indices = @transform_5, window_bounds = array<i64: 8, 32>}]} {
    %c0 = arith.constant 0 : index
    %c0_0 = arith.constant 0 : index
    %0 = vector.load %arg1[%c0, %c0_0] : memref<8x32xf32, #tpu.memory_space<vmem>>, vector<8x32xf32>
    %cst = arith.constant dense<0.000000e+00> : vector<8xf32>
    %1 = vector.multi_reduction <add>, %0, %cst [1] : vector<8x32xf32> to vector<8xf32>
    %2 = vector.shape_cast %1 : vector<8xf32> to vector<8x1xf32>
    %cst_1 = arith.constant 3.200000e+01 : f32
    %3 = vector.broadcast %cst_1 : f32 to vector<8x1xf32>
    %4 = arith.divf %2, %3 : vector<8x1xf32>
    %5 = vector.broadcast %4 : vector<8x1xf32> to vector<8x32xf32>
    %6 = arith.subf %0, %5 : vector<8x32xf32>
    %7 = arith.mulf %6, %6 : vector<8x32xf32>
    %cst_2 = arith.constant dense<0.000000e+00> : vector<8xf32>
    %8 = vector.multi_reduction <add>, %7, %cst_2 [1] : vector<8x32xf32> to vector<8xf32>
    %9 = vector.shape_cast %8 : vector<8xf32> to vector<8x1xf32>
    %cst_3 = arith.constant 3.200000e+01 : f32
    %10 = vector.broadcast %cst_3 : f32 to vector<8x1xf32>
    %11 = arith.divf %9, %10 : vector<8x1xf32>
    %cst_4 = arith.constant 9.99999974E-6 : f32
    %12 = vector.broadcast %cst_4 : f32 to vector<8x1xf32>
    %13 = arith.addf %11, %12 : vector<8x1xf32>
    %14 = math.sqrt %13 : vector<8x1xf32>
    %c0_5 = arith.constant 0 : index
    %c0_6 = arith.constant 0 : index
    %15 = vector.load %arg2[%c0_5, %c0_6] : memref<8x1xf32, #tpu.memory_space<vmem>>, vector<8x1xf32>
    %c0_7 = arith.constant 0 : index
    %c0_8 = arith.constant 0 : index
    %16 = vector.load %arg3[%c0_7, %c0_8] : memref<8x1xf32, #tpu.memory_space<vmem>>, vector<8x1xf32>
    %17 = vector.broadcast %14 : vector<8x1xf32> to vector<8x32xf32>
    %18 = arith.divf %6, %17 : vector<8x32xf32>
    %19 = vector.broadcast %15 : vector<8x1xf32> to vector<8x32xf32>
    %20 = arith.mulf %18, %19 : vector<8x32xf32>
    %21 = vector.broadcast %16 : vector<8x1xf32> to vector<8x32xf32>
    %22 = arith.addf %20, %21 : vector<8x32xf32>
    %c0_9 = arith.constant 0 : index
    %c0_10 = arith.constant 0 : index
    %23 = vector.load %arg4[%c0_9, %c0_10] : memref<32x32xf32, #tpu.memory_space<vmem>>, vector<32x32xf32>
    %cst_11 = arith.constant dense<0.000000e+00> : vector<8x32xf32>
    %24 = tpu.matmul %22, %23, %cst_11 {dimension_numbers = #tpu.dot_dimension_numbers<[1], [0], [0], [1], [0, 0, 1, 1], [], []>} : vector<8x32xf32>, vector<32x32xf32>, vector<8x32xf32> -> vector<8x32xf32>
    %c0_12 = arith.constant 0 : index
    %c0_13 = arith.constant 0 : index
    %25 = vector.load %arg5[%c0_12, %c0_13] : memref<1x32xf32, #tpu.memory_space<vmem>>, vector<1x32xf32>
    %26 = vector.broadcast %25 : vector<1x32xf32> to vector<8x32xf32>
    %27 = arith.addf %24, %26 : vector<8x32xf32>
    %28 = vector.broadcast %16 : vector<8x1xf32> to vector<8x32xf32>
    %29 = arith.subf %27, %28 : vector<8x32xf32>
    %cst_14 = arith.constant 1.000000e-10 : f32
    %30 = vector.broadcast %cst_14 : f32 to vector<8x1xf32>
    %31 = arith.addf %15, %30 : vector<8x1xf32>
    %32 = vector.broadcast %31 : vector<8x1xf32> to vector<8x32xf32>
    %33 = arith.divf %29, %32 : vector<8x32xf32>
    %34 = vector.broadcast %14 : vector<8x1xf32> to vector<8x32xf32>
    %35 = arith.mulf %33, %34 : vector<8x32xf32>
    %36 = vector.broadcast %4 : vector<8x1xf32> to vector<8x32xf32>
    %37 = arith.addf %35, %36 : vector<8x32xf32>
    %c0_15 = arith.constant 0 : index
    %c0_16 = arith.constant 0 : index
    %38 = vector.load %arg6[%c0_15, %c0_16] : memref<8x32xf32, #tpu.memory_space<vmem>>, vector<8x32xf32>
    tpu.vector_store %arg6[%c0_15, %c0_16], %37 {strides = array<i32>} : memref<8x32xf32, #tpu.memory_space<vmem>>, vector<8x32xf32>,
    return
  }
  func.func @transform_0(%arg0: i32) -> (i32, i32) {
    %c0_i32 = arith.constant 0 : i32
    %c0_i32_0 = arith.constant 0 : i32
    return %arg0, %c0_i32 : i32, i32
  }
  func.func @transform_1(%arg0: i32) -> (i32, i32) {
    %c0_i32 = arith.constant 0 : i32
    %c0_i32_0 = arith.constant 0 : i32
    return %arg0, %c0_i32 : i32, i32
  }
  func.func @transform_2(%arg0: i32) -> (i32, i32) {
    %c0_i32 = arith.constant 0 : i32
    %c0_i32_0 = arith.constant 0 : i32
    return %arg0, %c0_i32 : i32, i32
  }
  func.func @transform_3(%arg0: i32) -> (i32, i32) {
    %c0_i32 = arith.constant 0 : i32
    %c0_i32_0 = arith.constant 0 : i32
    %c0_i32_1 = arith.constant 0 : i32
    return %c0_i32, %c0_i32_0 : i32, i32
  }
  func.func @transform_4(%arg0: i32) -> (i32, i32) {
    %c0_i32 = arith.constant 0 : i32
    %c0_i32_0 = arith.constant 0 : i32
    %c0_i32_1 = arith.constant 0 : i32
    return %c0_i32, %c0_i32_0 : i32, i32
  }
  func.func @transform_5(%arg0: i32) -> (i32, i32) {
    %c0_i32 = arith.constant 0 : i32
    %c0_i32_0 = arith.constant 0 : i32
    return %arg0, %c0_i32 : i32, i32
  }
}

</mosaic_0001>

<llo_original>
// kernel: film_forward.1
$region0: #{film_forward.1}
  #allocation0 [shape = 'u32[]', space=smem, size = 0x4, offset = 0x4, fixed_abs, tag = 'smem constant byte address 0x4 - core index']
  #allocation1 [shape = 'u32[144,128]{1,0:T(1,128)}', space=vmem, size = 0x12000, scoped, tag = 'internal scratch']
  %s0 = inlined_call_operand.vmem [shape: f32[8,32], index: 0, kind: input, shape index: {}]
  %s1 = inlined_call_operand.vmem [shape: f32[8,1], index: 1, kind: input, shape index: {}]
  %s2 = inlined_call_operand.vmem [shape: f32[8,1], index: 2, kind: input, shape index: {}]
  %s3 = inlined_call_operand.vmem [shape: f32[32,32], index: 3, kind: input, shape index: {}]
  %s4 = inlined_call_operand.vmem [shape: f32[1,32], index: 4, kind: input, shape index: {}]
  %s5 = inlined_call_operand.vmem [shape: f32[8,32], index: 5, kind: output, shape index: {}]
  %s6 = sld [smem:[#allocation0]]
  $region30: #{film_forward.1} parent=0
    _
  %s8 = ssub.s32 1, %s6
  %s9 = scalar_select 0, %s8, %s6
  // Predicated region
  $region2: #{film_forward.1} parent=0 // pred_check
    _
  $region3: #{film_forward.1} parent=0 // pred_check_branch
    %11 = sbr.rel (0) target = $region5
  $region4: #{film_forward.1} parent=0 // pred_region
    _
  $region5: #{film_forward.1} parent=0 // pred_fallthru
    _
  // Predicated region
  $region6: #{film_forward.1} parent=0 // pred_check
    _
  $region7: #{film_forward.1} parent=0 // pred_check_branch
    %13 = sbr.rel (0) target = $region9
  $region8: #{film_forward.1} parent=0 // pred_region
    _
  $region9: #{film_forward.1} parent=0 // pred_fallthru
    _
  // Predicated region
  $region10: #{film_forward.1} parent=0 // pred_check
    _
  $region11: #{film_forward.1} parent=0 // pred_check_branch
    %15 = sbr.rel (0) target = $region13
  $region12: #{film_forward.1} parent=0 // pred_region
    _
  $region13: #{film_forward.1} parent=0 // pred_fallthru
    _
  // Predicated region
  $region14: #{film_forward.1} parent=0 // pred_check
    _
  $region15: #{film_forward.1} parent=0 // pred_check_branch
    %17 = sbr.rel (0) target = $region17
  $region16: #{film_forward.1} parent=0 // pred_region
    _
  $region17: #{film_forward.1} parent=0 // pred_fallthru
    _
  // Predicated region
  $region18: #{film_forward.1} parent=0 // pred_check
    _
  $region19: #{film_forward.1} parent=0 // pred_check_branch
    %19 = sbr.rel (0) target = $region21
  $region20: #{film_forward.1} parent=0 // pred_region
    _
  $region21: #{film_forward.1} parent=0 // pred_fallthru
    _
  %v20 = vld [vmem:[%s0] sm:$0xff]
  %vm21 = vcmask 261120
  %v22 = vsel %vm21, %v20, 0.0
  %23 = vadd.xlane.f32.xlu0 %v22
  %v24 = vpop.xlane.xlu0 %23
  %v25 = vrcp.pop 32.0
  %v26 = vmul.f32 %v24, %v25
  %v27 = vsub.f32 %v20, %v26
  %v28 = vmul.f32 %v27, %v27
  %v29 = vsel %vm21, %v28, 0.0
  %30 = vadd.xlane.f32.xlu0 %v29
  %v31 = vpop.xlane.xlu0 %30
  %v32 = vmul.f32 %v31, %v25
  %v33 = vadd.f32 %v32, 1e-05
  %v34 = vrsqrt.pop %v33
  %v35 = vmul.f32 %v33, %v34
  %vm36 = vcmp.eq.f32.partialorder %v33, inf
  %v37 = vsel %vm36, %v33, %v35
  %vm38 = vcmp.eq.f32.partialorder %v33, 0.0
  %v39 = vand.u32 %v33, 2147483648
  %v40 = vsel %vm38, %v39, %v37
  %v41 = vld [vmem:[%s1] sm:$0xff]
  %v42 = vld [vmem:[%s2] sm:$0xff]
  %v43 = vrcp.pop %v40
  %v44 = vmul.f32 %v27, %v43
  %46 = vset.pattern.permute.xlu0 0
  %47 = vperm.xlu0 %46, %v41
  %v48 = vpop.permute.xlu0 %47
  %v50 = vmul.f32 %v44, %v48
  %52 = vset.pattern.permute.xlu0 0
  %53 = vperm.xlu0 %52, %v42
  %v54 = vpop.permute.xlu0 %53
  %v56 = vadd.f32 %v50, %v54
  %v57 = vld [vmem:[%s3] sm:$0xff]
  %v58 = vld [vmem:[%s3 + $0x8] sm:$0xff]
  %v59 = vld [vmem:[%s3 + $0x10] sm:$0xff]
  %v60 = vld [vmem:[%s3 + $0x18] sm:$0xff]
  %v61 = vld [vmem:[%s4] sm:$0x1]
  %v63 = vlaneseq
  %v64 = vshrl.u32 %v63, 7
  %v65 = vsub.s32 0, %v64
  %v66 = vrot.slane %v61, %v65
  %v69 = vsel %vm21, %v56, 0
  %71 = vmatprep.subr.mxu0 0.0
  %72 = vmatpush1.msra.mxu0 0.0
  %73 = vmatprep.subr.mxu0 0.0
  %74 = vmatpush1.msra.mxu0 0.0
  %75 = vmatprep.subr.mxu0 0.0
  %76 = vmatpush1.msra.mxu0 0.0
  %77 = vmatprep.subr.mxu0 0.0
  %78 = vmatpush1.msra.mxu0 0.0
  %79 = vmatprep.subr.mxu0 0.0
  %80 = vmatpush1.msra.mxu0 0.0
  %81 = vmatprep.subr.mxu0 0.0
  %82 = vmatpush1.msra.mxu0 0.0
  %83 = vmatprep.subr.mxu0 0.0
  %84 = vmatpush1.msra.mxu0 0.0
  %85 = vmatprep.subr.mxu0 0.0
  %86 = vmatpush1.msra.mxu0 0.0
  %87 = vmatprep.subr.mxu0 0.0
  %88 = vmatpush1.msra.mxu0 0.0
  %89 = vmatprep.subr.mxu0 0.0
  %90 = vmatpush1.msra.mxu0 0.0
  %91 = vmatprep.subr.mxu0 0.0
  %92 = vmatpush1.msra.mxu0 0.0
  %93 = vmatprep.subr.mxu0 0.0
  %94 = vmatpush1.msra.mxu0 0.0
  %95 = vmatprep.subr.mxu0 0.0
  %96 = vmatpush1.msra.mxu0 %v60
  %97 = vmatprep.subr.mxu0 0.0
  %98 = vmatpush1.msra.mxu0 %v59
  %99 = vmatprep.subr.mxu0 0.0
  %100 = vmatpush1.msra.mxu0 %v58
  %101 = vmatprep.subr.mxu0 0.0
  %102 = vmatpush1.msra.mxu0 %v57
  %103 = vmatprep.subr.mxu0 0.0
  %104 = vmatpush2.msra.mxu0 0.0
  %105 = vmatprep.subr.mxu0 0.0
  %106 = vmatpush2.msra.mxu0 0.0
  %107 = vmatprep.subr.mxu0 0.0
  %108 = vmatpush2.msra.mxu0 0.0
  %109 = vmatprep.subr.mxu0 0.0
  %110 = vmatpush2.msra.mxu0 0.0
  %111 = vmatprep.subr.mxu0 0.0
  %112 = vmatpush2.msra.mxu0 0.0
  %113 = vmatprep.subr.mxu0 0.0
  %114 = vmatpush2.msra.mxu0 0.0
  %115 = vmatprep.subr.mxu0 0.0
  %116 = vmatpush2.msra.mxu0 0.0
  %117 = vmatprep.subr.mxu0 0.0
  %118 = vmatpush2.msra.mxu0 0.0
  %119 = vmatprep.subr.mxu0 0.0
  %120 = vmatpush2.msra.mxu0 0.0
  %121 = vmatprep.subr.mxu0 0.0
  %122 = vmatpush2.msra.mxu0 0.0
  %123 = vmatprep.subr.mxu0 0.0
  %124 = vmatpush2.msra.mxu0 0.0
  %125 = vmatprep.subr.mxu0 0.0
  %126 = vmatpush2.msra.mxu0 0.0
  %127 = vmatprep.subr.mxu0 0.0
  %128 = vmatpush2.msra.mxu0 0.0
  %129 = vmatprep.subr.mxu0 0.0
  %130 = vmatpush2.msra.mxu0 0.0
  %131 = vmatprep.subr.mxu0 0.0
  %132 = vmatpush2.msra.mxu0 0.0
  %133 = vmatprep.subr.mxu0 0.0
  %134 = vmatpush2.msra.mxu0 0.0
  %135 = vmatprep.mubr.f32.mxu0 0.0
  %136 = vmatmul.mubr.f32.gmra.mxu0 %v69
  %v137 = vpop.f32.mrf.mxu0
  %v138 = vadd.f32 %v66, %v137
  %v139 = vpop.f32.mrf.mxu0
  %140 = vdwg.mxu0
  %v141 = vsub.f32 %v138, %v54
  %v142 = vadd.f32 %v41, 1e-10
  %144 = vset.pattern.permute.xlu0 0
  %145 = vperm.xlu0 %144, %v142
  %v146 = vpop.permute.xlu0 %145
  %v148 = vrcp.pop %v146
  %v149 = vmul.f32 %v141, %v148
  %v150 = vmul.f32 %v149, %v40
  %v151 = vadd.f32 %v150, %v26
  %152 = vst.msk [vmem:[%s5] sm:$0xff] %vm21, %v151
  // Predicated region
  $region22: #{film_forward.1} parent=0 // pred_check
    _
  $region23: #{film_forward.1} parent=0 // pred_check_branch
    %154 = sbr.rel (0) target = $region25
  $region24: #{film_forward.1} parent=0 // pred_region
    _
  $region25: #{film_forward.1} parent=0 // pred_fallthru
    _
  // Predicated region
  $region26: #{film_forward.1} parent=0 // pred_check
    _
  $region27: #{film_forward.1} parent=0 // pred_check_branch
    %156 = sbr.rel (0) target = $region29
  $region28: #{film_forward.1} parent=0 // pred_region
    _
  $region29: #{film_forward.1} parent=0 // pred_fallthru
    _

</llo_original>
